<compile_context>
chip_gen: v6e
topology: v6e:2x2x1
jax: 0.10.0
libtpu: 0.0.40
codegen_flags: <defaults>
</compile_context>

<pallas_src>
import jax
import jax.numpy as jnp
from jax.experimental import pallas as pl
from jax.experimental.pallas import tpu as pltpu


# ---------------------------------------------------------------------------
# Pallas kernel
# ---------------------------------------------------------------------------
def critic_kernel(x_ref, w1_ref, b1_ref, w2_ref, b2_ref, v_ref):
    # hidden = tanh(x @ W1 + b1)   (f32 MXU accumulate, f32 tanh on the EUP)
    h = jnp.tanh(
        jnp.dot(x_ref[...], w1_ref[...], preferred_element_type=jnp.float32)
        + b1_ref[...]
    )
    # value = h @ W2 + b2
    v_ref[...] = (
        jnp.dot(h, w2_ref[...], preferred_element_type=jnp.float32) + b2_ref[...]
    ).astype(v_ref.dtype)


# ---------------------------------------------------------------------------
# Wrapper
# ---------------------------------------------------------------------------
def critic_forward(x, params, *, tile_b=256):
    """v = tanh(x @ W1 + b1) @ W2 + b2, computed tile-by-tile over the batch."""
    B, H = x.shape
    w1, b1, w2, b2 = params["w1"], params["b1"], params["w2"], params["b2"]

    # Batch tile must satisfy the (8, 128) sublane rule: either the full batch
    # (single block) or a multiple-of-8 tile, padding B up to a multiple of it.
    if B <= tile_b:
        tb, Bp = B, B
        xp = x
    else:
        tb = tile_b                         # 256: multiple of 8, good pipeline size
        Bp = pl.cdiv(B, tb) * tb
        xp = jnp.pad(x, ((0, Bp - B), (0, 0)))   # zero rows, sliced off below
    grid = (Bp // tb,)

    flops = 2 * Bp * H * (H + 1)
    bytes_accessed = 4 * (Bp * H + H * H + H + H + 1 + Bp)

    out = pl.pallas_call(
        critic_kernel,
        out_shape=jax.ShapeDtypeStruct((Bp, 1), x.dtype),
        grid=grid,
        in_specs=[
            pl.BlockSpec((tb, H), lambda i: (i, 0)),  # x tile (double-buffered)
            pl.BlockSpec((H, H), lambda i: (0, 0)),   # W1, resident across tiles
            pl.BlockSpec((1, H), lambda i: (0, 0)),   # b1
            pl.BlockSpec((H, 1), lambda i: (0, 0)),   # W2
            pl.BlockSpec((1, 1), lambda i: (0, 0)),   # b2
        ],
        out_specs=pl.BlockSpec((tb, 1), lambda i: (i, 0)),
        compiler_params=pltpu.CompilerParams(
            dimension_semantics=("parallel",),        # 2 TCs on v7x
        ),
        cost_estimate=pl.CostEstimate(
            flops=flops, transcendentals=Bp * H, bytes_accessed=bytes_accessed),
    )(xp, w1, b1, w2, b2)
    return out[:B]


# ---------------------------------------------------------------------------
# Deterministic parameter init (synthetic; mirrors InitLinear shapes)
# ---------------------------------------------------------------------------
# TODO(synk): InitLinear's exact weight-init scheme is not replicated here; only the
#             forward math matters for this kernel.
def init_critic_params(key, n_hidden):
    ks = jax.random.split(key, 4)
    scale = 1.0 / jnp.sqrt(n_hidden)
    return {
        "w1": jax.random.normal(ks[0], (n_hidden, n_hidden), jnp.float32) * scale,
        "b1": jax.random.normal(ks[1], (1, n_hidden), jnp.float32) * 0.01,
        "w2": jax.random.normal(ks[2], (n_hidden, 1), jnp.float32) * scale,
        "b2": jax.random.normal(ks[3], (1, 1), jnp.float32) * 0.01,
    }


# ---------------------------------------------------------------------------
# Pure-JAX reference for correctness check
# ---------------------------------------------------------------------------
def ref_critic(x, p):
    h = jnp.tanh(x @ p["w1"] + p["b1"])
    return h @ p["w2"] + p["b2"]


if __name__ == "__main__":
    H = 32  # n_hidden

    key = jax.random.PRNGKey(0)
    k_x1, k_x2, k_p = jax.random.split(key, 3)
    params = init_critic_params(k_p, H)

    # Case 1: small batch -> single block (block == full batch).
    x_small = jax.random.normal(k_x1, (8, H), jnp.float32)
    v_small = critic_forward(x_small, params)
    jax.block_until_ready(v_small)
    assert v_small.shape == (8, 1), "value shape mismatch (small)"
    assert jnp.allclose(v_small, ref_critic(x_small, params), atol=1e-5), \
        "value mismatch (small batch)"

    # Case 2: batch larger than tile -> padded, batch grid of 3 parallel tiles.
    x_grid = jax.random.normal(k_x2, (40, H), jnp.float32)
    v_grid = critic_forward(x_grid, params, tile_b=16)
    jax.block_until_ready(v_grid)
    assert v_grid.shape == (40, 1), "value shape mismatch (grid)"
    assert jnp.allclose(v_grid, ref_critic(x_grid, params), atol=1e-5), \
        "value mismatch (batch grid)"

    print("KERNEL_OK")
</pallas_src>

<mosaic_0001>
module attributes {stable_mosaic.version = 11 : i64} {
  func.func @critic_kernel(%arg0: i32, %arg1: memref<8x32xf32, #tpu.memory_space<vmem>>, %arg2: memref<32x32xf32, #tpu.memory_space<vmem>>, %arg3: memref<1x32xf32, #tpu.memory_space<vmem>>, %arg4: memref<32x1xf32, #tpu.memory_space<vmem>>, %arg5: memref<1x1xf32, #tpu.memory_space<vmem>>, %arg6: memref<8x1xf32, #tpu.memory_space<vmem>>) attributes {dimension_semantics = [#tpu.dimension_semantics<parallel>], iteration_bounds = array<i64: 1>, scalar_prefetch = 0 : i64, scratch_operands = 0 : i64, tpu.core_type = #tpu.core_type<tc>, window_params = [{transform_indices = @transform_0, window_bounds = array<i64: 8, 32>}, {pipeline_mode = #tpu.pipeline_mode<synchronous>, transform_indices = @transform_1, window_bounds = array<i64: 32, 32>}, {pipeline_mode = #tpu.pipeline_mode<synchronous>, transform_indices = @transform_2, window_bounds = array<i64: 1, 32>}, {pipeline_mode = #tpu.pipeline_mode<synchronous>, transform_indices = @transform_3, window_bounds = array<i64: 32, 1>}, {pipeline_mode = #tpu.pipeline_mode<synchronous>, transform_indices = @transform_4, window_bounds = array<i64: 1, 1>}, {transform_indices = @transform_5, window_bounds = array<i64: 8, 1>}]} {
    %c0 = arith.constant 0 : index
    %c0_0 = arith.constant 0 : index
    %0 = vector.load %arg1[%c0, %c0_0] : memref<8x32xf32, #tpu.memory_space<vmem>>, vector<8x32xf32>
    %c0_1 = arith.constant 0 : index
    %c0_2 = arith.constant 0 : index
    %1 = vector.load %arg2[%c0_1, %c0_2] : memref<32x32xf32, #tpu.memory_space<vmem>>, vector<32x32xf32>
    %cst = arith.constant dense<0.000000e+00> : vector<8x32xf32>
    %2 = tpu.matmul %0, %1, %cst {dimension_numbers = #tpu.dot_dimension_numbers<[1], [0], [0], [1], [0, 0, 1, 1], [], []>} : vector<8x32xf32>, vector<32x32xf32>, vector<8x32xf32> -> vector<8x32xf32>
    %c0_3 = arith.constant 0 : index
    %c0_4 = arith.constant 0 : index
    %3 = vector.load %arg3[%c0_3, %c0_4] : memref<1x32xf32, #tpu.memory_space<vmem>>, vector<1x32xf32>
    %4 = vector.broadcast %3 : vector<1x32xf32> to vector<8x32xf32>
    %5 = arith.addf %2, %4 : vector<8x32xf32>
    %6 = math.tanh %5 : vector<8x32xf32>
    %c0_5 = arith.constant 0 : index
    %c0_6 = arith.constant 0 : index
    %7 = vector.load %arg4[%c0_5, %c0_6] : memref<32x1xf32, #tpu.memory_space<vmem>>, vector<32x1xf32>
    %cst_7 = arith.constant dense<0.000000e+00> : vector<8x1xf32>
    %8 = tpu.matmul %6, %7, %cst_7 {dimension_numbers = #tpu.dot_dimension_numbers<[1], [0], [0], [1], [0, 0, 1, 1], [], []>} : vector<8x32xf32>, vector<32x1xf32>, vector<8x1xf32> -> vector<8x1xf32>
    %c0_8 = arith.constant 0 : index
    %c0_9 = arith.constant 0 : index
    %9 = vector.load %arg5[%c0_8, %c0_9] : memref<1x1xf32, #tpu.memory_space<vmem>>, vector<1x1xf32>
    %10 = vector.broadcast %9 : vector<1x1xf32> to vector<8x1xf32>
    %11 = arith.addf %8, %10 : vector<8x1xf32>
    %c0_10 = arith.constant 0 : index
    %c0_11 = arith.constant 0 : index
    %12 = vector.load %arg6[%c0_10, %c0_11] : memref<8x1xf32, #tpu.memory_space<vmem>>, vector<8x1xf32>
    tpu.vector_store %arg6[%c0_10, %c0_11], %11 {strides = array<i32>} : memref<8x1xf32, #tpu.memory_space<vmem>>, vector<8x1xf32>,
    return
  }
  func.func @transform_0(%arg0: i32) -> (i32, i32) {
    %c0_i32 = arith.constant 0 : i32
    %c0_i32_0 = arith.constant 0 : i32
    return %arg0, %c0_i32 : i32, i32
  }
  func.func @transform_1(%arg0: i32) -> (i32, i32) {
    %c0_i32 = arith.constant 0 : i32
    %c0_i32_0 = arith.constant 0 : i32
    %c0_i32_1 = arith.constant 0 : i32
    return %c0_i32, %c0_i32_0 : i32, i32
  }
  func.func @transform_2(%arg0: i32) -> (i32, i32) {
    %c0_i32 = arith.constant 0 : i32
    %c0_i32_0 = arith.constant 0 : i32
    %c0_i32_1 = arith.constant 0 : i32
    return %c0_i32, %c0_i32_0 : i32, i32
  }
  func.func @transform_3(%arg0: i32) -> (i32, i32) {
    %c0_i32 = arith.constant 0 : i32
    %c0_i32_0 = arith.constant 0 : i32
    %c0_i32_1 = arith.constant 0 : i32
    return %c0_i32, %c0_i32_0 : i32, i32
  }
  func.func @transform_4(%arg0: i32) -> (i32, i32) {
    %c0_i32 = arith.constant 0 : i32
    %c0_i32_0 = arith.constant 0 : i32
    %c0_i32_1 = arith.constant 0 : i32
    return %c0_i32, %c0_i32_0 : i32, i32
  }
  func.func @transform_5(%arg0: i32) -> (i32, i32) {
    %c0_i32 = arith.constant 0 : i32
    %c0_i32_0 = arith.constant 0 : i32
    return %arg0, %c0_i32 : i32, i32
  }
}

</mosaic_0001>

<llo_original>
// kernel: tpu_custom_call.1
$region0: #{tpu_custom_call.1}
  #allocation0 [shape = 'u32[]', space=smem, size = 0x4, offset = 0x4, fixed_abs, tag = 'smem constant byte address 0x4 - core index']
  #allocation1 [shape = 'u32[144,128]{1,0:T(1,128)}', space=vmem, size = 0x12000, scoped, tag = 'internal scratch']
  #allocation2 [shape = 'f32[1,1]{1,0:T(1,128)S(1)}', space=vmem, size = 0x200, scoped, tag = 'scoped memory for tpu_custom_call.1']
  %s0 = inlined_call_operand.hbm [shape: f32[8,32], index: 0, kind: input, shape index: {}]
  %s1 = inlined_call_operand.vmem [shape: f32[32,32], index: 1, kind: input, shape index: {}]
  %s2 = inlined_call_operand.vmem [shape: f32[1,32], index: 2, kind: input, shape index: {}]
  %s3 = inlined_call_operand.vmem [shape: f32[32,1], index: 3, kind: input, shape index: {}]
  %s4 = inlined_call_operand.<no memory space> [shape: f32[1,1], index: 4, kind: input, shape index: {}]
  %s5 = inlined_call_operand.vmem [shape: f32[8,1], index: 5, kind: output, shape index: {}]
  %s6 = sld [smem:[#allocation0]]
  $region34: #{tpu_custom_call.1} parent=0
    _
  %s8 = ssub.s32 1, %s6
  %s9 = scalar_select 0, %s8, %s6
  %v10 = vstv %s4
  %11 = vst [vmem:[#allocation2] sm:$0x1] %v10
  $region1: #{tpu_custom_call.1} parent=0
    #allocation3 [shape = 'u8[4096]{0}', space=vmem, size = 0x1000, scoped, tag = 'input window, operand 0, single buffered']
    #allocation4 [shape = 's32[1]{0}', space=sflag, size = 0x4, scoped, tag = 'scoped memory for tpu_custom_call.1']
    %12 = vsyncpa [#allocation4], 0
    // Predicated region
    $region2: #{tpu_custom_call.1} parent=1 // pred_check
      _
    $region3: #{tpu_custom_call.1} parent=1 // pred_check_branch
      %14 = sbr.rel (0) target = $region5
    $region4: #{tpu_custom_call.1} parent=1 // pred_region
      %s16 = ssub.s32 128, 128
      %17 = vsyncadd [#allocation4], %s16
      %s19 = sshll.u32 [#allocation3], 4
      %s20 = int_to_ptr.vmem [resolvable:$true] %s19
      %22 = dma.hbm_to_vmem [thread:$0]  %s0, 128, %s20, [#allocation4]
    $region5: #{tpu_custom_call.1} parent=1 // pred_fallthru
      _
    // Predicated region
    $region6: #{tpu_custom_call.1} parent=1 // pred_check
      _
    $region7: #{tpu_custom_call.1} parent=1 // pred_check_branch
      %24 = sbr.rel (0) target = $region9
    $region8: #{tpu_custom_call.1} parent=1 // pred_region
      _
    $region9: #{tpu_custom_call.1} parent=1 // pred_fallthru
      _
    // Predicated region
    $region10: #{tpu_custom_call.1} parent=1 // pred_check
      _
    $region11: #{tpu_custom_call.1} parent=1 // pred_check_branch
      %26 = sbr.rel (0) target = $region13
    $region12: #{tpu_custom_call.1} parent=1 // pred_region
      _
    $region13: #{tpu_custom_call.1} parent=1 // pred_fallthru
      _
    // Predicated region
    $region14: #{tpu_custom_call.1} parent=1 // pred_check
      _
    $region15: #{tpu_custom_call.1} parent=1 // pred_check_branch
      %28 = sbr.rel (0) target = $region17
    $region16: #{tpu_custom_call.1} parent=1 // pred_region
      _
    $region17: #{tpu_custom_call.1} parent=1 // pred_fallthru
      _
    // Predicated region
    $region18: #{tpu_custom_call.1} parent=1 // pred_check
      _
    $region19: #{tpu_custom_call.1} parent=1 // pred_check_branch
      %30 = sbr.rel (0) target = $region21
    $region20: #{tpu_custom_call.1} parent=1 // pred_region
      _
    $region21: #{tpu_custom_call.1} parent=1 // pred_fallthru
      _
    // Predicated region
    $region22: #{tpu_custom_call.1} parent=1 // pred_check
      _
    $region23: #{tpu_custom_call.1} parent=1 // pred_check_branch
      %32 = sbr.rel (0) target = $region25
    $region24: #{tpu_custom_call.1} parent=1 // pred_region
      %33 = dma.done [#allocation4], 128
    $region25: #{tpu_custom_call.1} parent=1 // pred_fallthru
      _
    %v34 = vld [vmem:[#allocation3] sm:$0xff]
    %v35 = vld [vmem:[%s1] sm:$0xff]
    %v36 = vld [vmem:[%s1 + $0x8] sm:$0xff]
    %v37 = vld [vmem:[%s1 + $0x10] sm:$0xff]
    %v38 = vld [vmem:[%s1 + $0x18] sm:$0xff]
    %v39 = vld [vmem:[%s2] sm:$0x1]
    %v41 = vlaneseq
    %v42 = vshrl.u32 %v41, 7
    %v43 = vsub.s32 0, %v42
    %v44 = vrot.slane %v39, %v43
    %vm46 = vcmask 261120
    %v48 = vsel %vm46, %v34, 0
    %50 = vmatprep.subr.mxu0 0.0
    %51 = vmatpush1.msra.mxu0 0.0
    %52 = vmatprep.subr.mxu0 0.0
    %53 = vmatpush1.msra.mxu0 0.0
    %54 = vmatprep.subr.mxu0 0.0
    %55 = vmatpush1.msra.mxu0 0.0
    %56 = vmatprep.subr.mxu0 0.0
    %57 = vmatpush1.msra.mxu0 0.0
    %58 = vmatprep.subr.mxu0 0.0
    %59 = vmatpush1.msra.mxu0 0.0
    %60 = vmatprep.subr.mxu0 0.0
    %61 = vmatpush1.msra.mxu0 0.0
    %62 = vmatprep.subr.mxu0 0.0
    %63 = vmatpush1.msra.mxu0 0.0
    %64 = vmatprep.subr.mxu0 0.0
    %65 = vmatpush1.msra.mxu0 0.0
    %66 = vmatprep.subr.mxu0 0.0
    %67 = vmatpush1.msra.mxu0 0.0
    %68 = vmatprep.subr.mxu0 0.0
    %69 = vmatpush1.msra.mxu0 0.0
    %70 = vmatprep.subr.mxu0 0.0
    %71 = vmatpush1.msra.mxu0 0.0
    %72 = vmatprep.subr.mxu0 0.0
    %73 = vmatpush1.msra.mxu0 0.0
    %74 = vmatprep.subr.mxu0 0.0
    %75 = vmatpush1.msra.mxu0 %v38
    %76 = vmatprep.subr.mxu0 0.0
    %77 = vmatpush1.msra.mxu0 %v37
    %78 = vmatprep.subr.mxu0 0.0
    %79 = vmatpush1.msra.mxu0 %v36
    %80 = vmatprep.subr.mxu0 0.0
    %81 = vmatpush1.msra.mxu0 %v35
    %82 = vmatprep.subr.mxu0 0.0
    %83 = vmatpush2.msra.mxu0 0.0
    %84 = vmatprep.subr.mxu0 0.0
    %85 = vmatpush2.msra.mxu0 0.0
    %86 = vmatprep.subr.mxu0 0.0
    %87 = vmatpush2.msra.mxu0 0.0
    %88 = vmatprep.subr.mxu0 0.0
    %89 = vmatpush2.msra.mxu0 0.0
    %90 = vmatprep.subr.mxu0 0.0
    %91 = vmatpush2.msra.mxu0 0.0
    %92 = vmatprep.subr.mxu0 0.0
    %93 = vmatpush2.msra.mxu0 0.0
    %94 = vmatprep.subr.mxu0 0.0
    %95 = vmatpush2.msra.mxu0 0.0
    %96 = vmatprep.subr.mxu0 0.0
    %97 = vmatpush2.msra.mxu0 0.0
    %98 = vmatprep.subr.mxu0 0.0
    %99 = vmatpush2.msra.mxu0 0.0
    %100 = vmatprep.subr.mxu0 0.0
    %101 = vmatpush2.msra.mxu0 0.0
    %102 = vmatprep.subr.mxu0 0.0
    %103 = vmatpush2.msra.mxu0 0.0
    %104 = vmatprep.subr.mxu0 0.0
    %105 = vmatpush2.msra.mxu0 0.0
    %106 = vmatprep.subr.mxu0 0.0
    %107 = vmatpush2.msra.mxu0 0.0
    %108 = vmatprep.subr.mxu0 0.0
    %109 = vmatpush2.msra.mxu0 0.0
    %110 = vmatprep.subr.mxu0 0.0
    %111 = vmatpush2.msra.mxu0 0.0
    %112 = vmatprep.subr.mxu0 0.0
    %113 = vmatpush2.msra.mxu0 0.0
    %114 = vmatprep.mubr.f32.mxu0 0.0
    %115 = vmatmul.mubr.f32.gmra.mxu0 %v48
    %v116 = vpop.f32.mrf.mxu0
    %v117 = vadd.f32 %v44, %v116
    %v118 = vpop.f32.mrf.mxu0
    %119 = vdwg.mxu0
    %v120 = vtanh.pop %v117
    %v121 = vld [vmem:[%s3] sm:$0xff]
    %v122 = vld [vmem:[%s3 + $0x8] sm:$0xff]
    %v123 = vld [vmem:[%s3 + $0x10] sm:$0xff]
    %v124 = vld [vmem:[%s3 + $0x18] sm:$0xff]
    %v125 = vld [vmem:[#allocation2] sm:$0x1]
    %v127 = vlaneseq
    %v128 = vshrl.u32 %v127, 7
    %v129 = vsub.s32 0, %v128
    %v130 = vrot.slane %v125, %v129
    %v133 = vsel %vm46, %v120, 0
    %135 = vmatprep.subr.mxu0 0.0
    %136 = vmatpush1.msra.mxu0 0.0
    %137 = vmatprep.subr.mxu0 0.0
    %138 = vmatpush1.msra.mxu0 0.0
    %139 = vmatprep.subr.mxu0 0.0
    %140 = vmatpush1.msra.mxu0 0.0
    %141 = vmatprep.subr.mxu0 0.0
    %142 = vmatpush1.msra.mxu0 0.0
    %143 = vmatprep.subr.mxu0 0.0
    %144 = vmatpush1.msra.mxu0 0.0
    %145 = vmatprep.subr.mxu0 0.0
    %146 = vmatpush1.msra.mxu0 0.0
    %147 = vmatprep.subr.mxu0 0.0
    %148 = vmatpush1.msra.mxu0 0.0
    %149 = vmatprep.subr.mxu0 0.0
    %150 = vmatpush1.msra.mxu0 0.0
    %151 = vmatprep.subr.mxu0 0.0
    %152 = vmatpush1.msra.mxu0 0.0
    %153 = vmatprep.subr.mxu0 0.0
    %154 = vmatpush1.msra.mxu0 0.0
    %155 = vmatprep.subr.mxu0 0.0
    %156 = vmatpush1.msra.mxu0 0.0
    %157 = vmatprep.subr.mxu0 0.0
    %158 = vmatpush1.msra.mxu0 0.0
    %159 = vmatprep.subr.mxu0 0.0
    %160 = vmatpush1.msra.mxu0 %v124
    %161 = vmatprep.subr.mxu0 0.0
    %162 = vmatpush1.msra.mxu0 %v123
    %163 = vmatprep.subr.mxu0 0.0
    %164 = vmatpush1.msra.mxu0 %v122
    %165 = vmatprep.subr.mxu0 0.0
    %166 = vmatpush1.msra.mxu0 %v121
    %167 = vmatprep.subr.mxu0 0.0
    %168 = vmatpush2.msra.mxu0 0.0
    %169 = vmatprep.subr.mxu0 0.0
    %170 = vmatpush2.msra.mxu0 0.0
    %171 = vmatprep.subr.mxu0 0.0
    %172 = vmatpush2.msra.mxu0 0.0
    %173 = vmatprep.subr.mxu0 0.0
    %174 = vmatpush2.msra.mxu0 0.0
    %175 = vmatprep.subr.mxu0 0.0
    %176 = vmatpush2.msra.mxu0 0.0
    %177 = vmatprep.subr.mxu0 0.0
    %178 = vmatpush2.msra.mxu0 0.0
    %179 = vmatprep.subr.mxu0 0.0
    %180 = vmatpush2.msra.mxu0 0.0
    %181 = vmatprep.subr.mxu0 0.0
    %182 = vmatpush2.msra.mxu0 0.0
    %183 = vmatprep.subr.mxu0 0.0
    %184 = vmatpush2.msra.mxu0 0.0
    %185 = vmatprep.subr.mxu0 0.0
    %186 = vmatpush2.msra.mxu0 0.0
    %187 = vmatprep.subr.mxu0 0.0
    %188 = vmatpush2.msra.mxu0 0.0
    %189 = vmatprep.subr.mxu0 0.0
    %190 = vmatpush2.msra.mxu0 0.0
    %191 = vmatprep.subr.mxu0 0.0
    %192 = vmatpush2.msra.mxu0 0.0
    %193 = vmatprep.subr.mxu0 0.0
    %194 = vmatpush2.msra.mxu0 0.0
    %195 = vmatprep.subr.mxu0 0.0
    %196 = vmatpush2.msra.mxu0 0.0
    %197 = vmatprep.subr.mxu0 0.0
    %198 = vmatpush2.msra.mxu0 0.0
    %199 = vmatprep.mubr.f32.mxu0 0.0
    %200 = vmatmul.mubr.f32.gmra.mxu0 %v133
    %v201 = vpop.f32.mrf.mxu0
    %v202 = vadd.f32 %v130, %v201
    %v203 = vpop.f32.mrf.mxu0
    %204 = vdwg.mxu0
    %vm205 = vcmask 7168
    %206 = vst.msk [vmem:[%s5] sm:$0xff] %vm205, %v202
    // Predicated region
    $region26: #{tpu_custom_call.1} parent=1 // pred_check
      _
    $region27: #{tpu_custom_call.1} parent=1 // pred_check_branch
      %208 = sbr.rel (0) target = $region29
    $region28: #{tpu_custom_call.1} parent=1 // pred_region
      _
    $region29: #{tpu_custom_call.1} parent=1 // pred_fallthru
      _
    // Predicated region
    $region30: #{tpu_custom_call.1} parent=1 // pred_check
      _
    $region31: #{tpu_custom_call.1} parent=1 // pred_check_branch
      %210 = sbr.rel (0) target = $region33
    $region32: #{tpu_custom_call.1} parent=1 // pred_region
      _
    $region33: #{tpu_custom_call.1} parent=1 // pred_fallthru
      _
    %211 = vsyncpa [#allocation4], 1

</llo_original>
